<compile_context>
chip_gen: v7x
topology: tpu7x:2x2x1
jax: 0.10.0
libtpu: 0.0.40
codegen_flags: <defaults>
</compile_context>

<pallas_src>
import jax
import jax.numpy as jnp
from jax.experimental import pallas as pl
from jax.experimental.pallas import tpu as pltpu

INPUT_SIZE = 1620
NUM_CLASSES = 2

LANE = 128     # last-dim tiling granularity
SUBLANE = 8    # second-to-last-dim tiling granularity
TM_MAX = 1024  # batch tile cap: bf16 x double-buffer ~6.8 MiB, safe on v5e/v6e/v7x


def linear_kernel(x_ref, w_ref, b_ref, o_ref):
    # x_ref: [TM, F_pad] bf16   w_ref: [F_pad, C] bf16   b_ref: [1, C] f32
    acc = jnp.dot(x_ref[...], w_ref[...], preferred_element_type=jnp.float32)  # MXU, f32 acc
    o_ref[...] = acc + b_ref[...]  # f32 bias broadcast over the batch tile


def _round_up(n, m):
    return ((n + m - 1) // m) * m


def logistic_regression_forward(x, w, b, *, tm_max=TM_MAX):
    """x: [B, F] f32, w: [F, C] f32 (pre-transposed), b: [1, C] f32 -> [B, C] f32 logits."""
    B, F = x.shape
    Fw, C = w.shape
    assert F == Fw and b.shape == (1, C)

    # Pad feature dim to a multiple of 128 (1620 -> 1664); zero pad contributes nothing.
    F_pad = _round_up(F, LANE)
    if F_pad != F:
        x = jnp.pad(x, ((0, 0), (0, F_pad - F)))
        w = jnp.pad(w, ((0, F_pad - F), (0, 0)))

    # Cast the bandwidth-dominant operands to bf16; bias stays f32 for the f32 epilogue.
    x = x.astype(jnp.bfloat16)
    w = w.astype(jnp.bfloat16)
    b = b.astype(jnp.float32)

    # Batch tile: multiple of 8 sublanes, capped so tiles fit scoped VMEM everywhere.
    TM = min(tm_max, _round_up(B, SUBLANE))
    B_pad = _round_up(B, TM)
    if B_pad != B:
        x = jnp.pad(x, ((0, B_pad - B), (0, 0)))

    out = pl.pallas_call(
        linear_kernel,
        out_shape=jax.ShapeDtypeStruct((B_pad, C), jnp.float32),
        grid=(B_pad // TM,),
        in_specs=[
            pl.BlockSpec((TM, F_pad), lambda i: (i, 0)),   # x: walks the batch
            pl.BlockSpec((F_pad, C), lambda i: (0, 0)),    # W: resident across the grid
            pl.BlockSpec((1, C), lambda i: (0, 0)),        # b: resident across the grid
        ],
        out_specs=pl.BlockSpec((TM, C), lambda i: (i, 0)),
        compiler_params=pltpu.CompilerParams(
            dimension_semantics=("parallel",),  # independent batch tiles (v7x dual-TC)
        ),
    )(x, w, b)
    return out[:B]


if __name__ == "__main__":
    key = jax.random.PRNGKey(0)
    kx, kw, kb = jax.random.split(key, 3)

    B = 8  # small batch

    # Deterministic init, mimicking nn.Linear's uniform(-1/sqrt(F), 1/sqrt(F)).
    bound = 1.0 / (INPUT_SIZE ** 0.5)
    w = jax.random.uniform(kw, (INPUT_SIZE, NUM_CLASSES), jnp.float32, -bound, bound)
    b = jax.random.uniform(kb, (1, NUM_CLASSES), jnp.float32, -bound, bound)
    x = jax.random.normal(kx, (B, INPUT_SIZE), jnp.float32)

    out = logistic_regression_forward(x, w, b)
    out = jax.block_until_ready(out)
    assert out.shape == (B, NUM_CLASSES)

    # Reference 1: same bf16 inputs, f32 accumulation (tight check).
    ref_bf = jnp.dot(x.astype(jnp.bfloat16).astype(jnp.float32),
                     w.astype(jnp.bfloat16).astype(jnp.float32)) + b
    assert jnp.allclose(out, ref_bf, atol=2e-3, rtol=2e-3)

    # Reference 2: full-f32 math (loose check for bf16 input rounding).
    ref_f32 = x @ w + b
    assert jnp.allclose(out, ref_f32, atol=5e-2, rtol=5e-2)

    print("KERNEL_OK")
</pallas_src>

<mosaic_0001>
module attributes {stable_mosaic.version = 11 : i64} {
  func.func @linear_kernel(%arg0: i32, %arg1: memref<8x1664xbf16, #tpu.memory_space<vmem>>, %arg2: memref<1664x2xbf16, #tpu.memory_space<vmem>>, %arg3: memref<1x2xf32, #tpu.memory_space<vmem>>, %arg4: memref<8x2xf32, #tpu.memory_space<vmem>>) attributes {dimension_semantics = [#tpu.dimension_semantics<parallel>], iteration_bounds = array<i64: 1>, scalar_prefetch = 0 : i64, scratch_operands = 0 : i64, tpu.core_type = #tpu.core_type<tc>, window_params = [{transform_indices = @transform_0, window_bounds = array<i64: 8, 1664>}, {pipeline_mode = #tpu.pipeline_mode<synchronous>, transform_indices = @transform_1, window_bounds = array<i64: 1664, 2>}, {pipeline_mode = #tpu.pipeline_mode<synchronous>, transform_indices = @transform_2, window_bounds = array<i64: 1, 2>}, {transform_indices = @transform_3, window_bounds = array<i64: 8, 2>}]} {
    %c0 = arith.constant 0 : index
    %c0_0 = arith.constant 0 : index
    %0 = vector.load %arg1[%c0, %c0_0] : memref<8x1664xbf16, #tpu.memory_space<vmem>>, vector<8x1664xbf16>
    %c0_1 = arith.constant 0 : index
    %c0_2 = arith.constant 0 : index
    %1 = vector.load %arg2[%c0_1, %c0_2] : memref<1664x2xbf16, #tpu.memory_space<vmem>>, vector<1664x2xbf16>
    %cst = arith.constant dense<0.000000e+00> : vector<8x2xf32>
    %2 = tpu.matmul %0, %1, %cst {dimension_numbers = #tpu.dot_dimension_numbers<[1], [0], [0], [1], [0, 0, 1, 1], [], []>} : vector<8x1664xbf16>, vector<1664x2xbf16>, vector<8x2xf32> -> vector<8x2xf32>
    %c0_3 = arith.constant 0 : index
    %c0_4 = arith.constant 0 : index
    %3 = vector.load %arg3[%c0_3, %c0_4] : memref<1x2xf32, #tpu.memory_space<vmem>>, vector<1x2xf32>
    %4 = vector.broadcast %3 : vector<1x2xf32> to vector<8x2xf32>
    %5 = arith.addf %2, %4 : vector<8x2xf32>
    %c0_5 = arith.constant 0 : index
    %c0_6 = arith.constant 0 : index
    %6 = vector.load %arg4[%c0_5, %c0_6] : memref<8x2xf32, #tpu.memory_space<vmem>>, vector<8x2xf32>
    tpu.vector_store %arg4[%c0_5, %c0_6], %5 {strides = array<i32>} : memref<8x2xf32, #tpu.memory_space<vmem>>, vector<8x2xf32>,
    return
  }
  func.func @transform_0(%arg0: i32) -> (i32, i32) {
    %c0_i32 = arith.constant 0 : i32
    %c0_i32_0 = arith.constant 0 : i32
    return %arg0, %c0_i32 : i32, i32
  }
  func.func @transform_1(%arg0: i32) -> (i32, i32) {
    %c0_i32 = arith.constant 0 : i32
    %c0_i32_0 = arith.constant 0 : i32
    %c0_i32_1 = arith.constant 0 : i32
    return %c0_i32, %c0_i32_0 : i32, i32
  }
  func.func @transform_2(%arg0: i32) -> (i32, i32) {
    %c0_i32 = arith.constant 0 : i32
    %c0_i32_0 = arith.constant 0 : i32
    %c0_i32_1 = arith.constant 0 : i32
    return %c0_i32, %c0_i32_0 : i32, i32
  }
  func.func @transform_3(%arg0: i32) -> (i32, i32) {
    %c0_i32 = arith.constant 0 : i32
    %c0_i32_0 = arith.constant 0 : i32
    return %arg0, %c0_i32 : i32, i32
  }
}

</mosaic_0001>

<llo_original>
// kernel: tpu_custom_call.1
$region0: #{tpu_custom_call.1}
  #allocation0 [shape = 'u32[]', space=smem, size = 0x4, offset = 0x4, fixed_abs, tag = 'smem constant byte address 0x4 - core index']
  #allocation1 [shape = 'u32[144,128]{1,0:T(1,128)}', space=vmem, size = 0x12000, scoped, tag = 'internal scratch']
  %s0 = inlined_call_operand.vmem [shape: bf16[8,1664], index: 0, kind: input, shape index: {}]
  %s1 = inlined_call_operand.vmem [shape: bf16[1664,2], index: 1, kind: input, shape index: {}]
  %s2 = inlined_call_operand.vmem [shape: f32[1,2], index: 2, kind: input, shape index: {}]
  %s3 = inlined_call_operand.vmem [shape: f32[8,2], index: 3, kind: output, shape index: {}]
  %s4 = sld [smem:[#allocation0]]
  $region22: #{tpu_custom_call.1} parent=0
    _
  %s6 = ssub.s32 1, %s4
  %s7 = scalar_select 0, %s6, %s4
  // Predicated region
  $region2: #{tpu_custom_call.1} parent=0 // pred_check
    _
  $region3: #{tpu_custom_call.1} parent=0 // pred_check_branch
    %9 = sbr.rel (0) target = $region5
  $region4: #{tpu_custom_call.1} parent=0 // pred_region
    _
  $region5: #{tpu_custom_call.1} parent=0 // pred_fallthru
    _
  // Predicated region
  $region6: #{tpu_custom_call.1} parent=0 // pred_check
    _
  $region7: #{tpu_custom_call.1} parent=0 // pred_check_branch
    %11 = sbr.rel (0) target = $region9
  $region8: #{tpu_custom_call.1} parent=0 // pred_region
    _
  $region9: #{tpu_custom_call.1} parent=0 // pred_fallthru
    _
  // Predicated region
  $region10: #{tpu_custom_call.1} parent=0 // pred_check
    _
  $region11: #{tpu_custom_call.1} parent=0 // pred_check_branch
    %13 = sbr.rel (0) target = $region13
  $region12: #{tpu_custom_call.1} parent=0 // pred_region
    _
  $region13: #{tpu_custom_call.1} parent=0 // pred_fallthru
    _
  %v15 = vld [vmem:[%s0] sm:$0xff]
  %v16 = vld [vmem:[%s0 + $0x8] sm:$0xff]
  %v17 = vld [vmem:[%s0 + $0x10] sm:$0xff]
  %v18 = vld [vmem:[%s0 + $0x18] sm:$0xff]
  %v19 = vld [vmem:[%s0 + $0x20] sm:$0xff]
  %v20 = vld [vmem:[%s0 + $0x28] sm:$0xff]
  %v21 = vld [vmem:[%s0 + $0x30] sm:$0xf]
  %v22 = vld [vmem:[%s1] sm:$0xf]
  %v23 = vld [vmem:[%s1 + $0x4] sm:$0xf]
  %v24 = vld [vmem:[%s1 + $0x8] sm:$0xf]
  %v25 = vld [vmem:[%s1 + $0xc] sm:$0xf]
  %v26 = vld [vmem:[%s1 + $0x10] sm:$0xf]
  %v27 = vld [vmem:[%s1 + $0x14] sm:$0xf]
  %v28 = vld [vmem:[%s1 + $0x18] sm:$0xf]
  %v29 = vld [vmem:[%s1 + $0x1c] sm:$0xf]
  %v30 = vld [vmem:[%s1 + $0x20] sm:$0xf]
  %v31 = vld [vmem:[%s1 + $0x24] sm:$0xf]
  %v32 = vld [vmem:[%s1 + $0x28] sm:$0xf]
  %v33 = vld [vmem:[%s1 + $0x2c] sm:$0xf]
  %v34 = vld [vmem:[%s1 + $0x30] sm:$0xf]
  %v35 = vld [vmem:[%s1 + $0x34] sm:$0xf]
  %v36 = vld [vmem:[%s1 + $0x38] sm:$0xf]
  %v37 = vld [vmem:[%s1 + $0x3c] sm:$0xf]
  %v38 = vld [vmem:[%s1 + $0x40] sm:$0xf]
  %v39 = vld [vmem:[%s1 + $0x44] sm:$0xf]
  %v40 = vld [vmem:[%s1 + $0x48] sm:$0xf]
  %v41 = vld [vmem:[%s1 + $0x4c] sm:$0xf]
  %v42 = vld [vmem:[%s1 + $0x50] sm:$0xf]
  %v43 = vld [vmem:[%s1 + $0x54] sm:$0xf]
  %v44 = vld [vmem:[%s1 + $0x58] sm:$0xf]
  %v45 = vld [vmem:[%s1 + $0x5c] sm:$0xf]
  %v46 = vld [vmem:[%s1 + $0x60] sm:$0xf]
  %v47 = vld [vmem:[%s1 + $0x64] sm:$0xf]
  %v48 = vld [vmem:[%s1 + $0x68] sm:$0xf]
  %v49 = vld [vmem:[%s1 + $0x6c] sm:$0xf]
  %v50 = vld [vmem:[%s1 + $0x70] sm:$0xf]
  %v51 = vld [vmem:[%s1 + $0x74] sm:$0xf]
  %v52 = vld [vmem:[%s1 + $0x78] sm:$0xf]
  %v53 = vld [vmem:[%s1 + $0x7c] sm:$0xf]
  %v54 = vld [vmem:[%s1 + $0x80] sm:$0xf]
  %v55 = vld [vmem:[%s1 + $0x84] sm:$0xf]
  %v56 = vld [vmem:[%s1 + $0x88] sm:$0xf]
  %v57 = vld [vmem:[%s1 + $0x8c] sm:$0xf]
  %v58 = vld [vmem:[%s1 + $0x90] sm:$0xf]
  %v59 = vld [vmem:[%s1 + $0x94] sm:$0xf]
  %v60 = vld [vmem:[%s1 + $0x98] sm:$0xf]
  %v61 = vld [vmem:[%s1 + $0x9c] sm:$0xf]
  %v62 = vld [vmem:[%s1 + $0xa0] sm:$0xf]
  %v63 = vld [vmem:[%s1 + $0xa4] sm:$0xf]
  %v64 = vld [vmem:[%s1 + $0xa8] sm:$0xf]
  %v65 = vld [vmem:[%s1 + $0xac] sm:$0xf]
  %v66 = vld [vmem:[%s1 + $0xb0] sm:$0xf]
  %v67 = vld [vmem:[%s1 + $0xb4] sm:$0xf]
  %v68 = vld [vmem:[%s1 + $0xb8] sm:$0xf]
  %v69 = vld [vmem:[%s1 + $0xbc] sm:$0xf]
  %v70 = vld [vmem:[%s1 + $0xc0] sm:$0xf]
  %v71 = vld [vmem:[%s1 + $0xc4] sm:$0xf]
  %v72 = vld [vmem:[%s1 + $0xc8] sm:$0xf]
  %v73 = vld [vmem:[%s1 + $0xcc] sm:$0xf]
  %v74 = vld [vmem:[%s1 + $0xd0] sm:$0xf]
  %v75 = vld [vmem:[%s1 + $0xd4] sm:$0xf]
  %v76 = vld [vmem:[%s1 + $0xd8] sm:$0xf]
  %v77 = vld [vmem:[%s1 + $0xdc] sm:$0xf]
  %v78 = vld [vmem:[%s1 + $0xe0] sm:$0xf]
  %v79 = vld [vmem:[%s1 + $0xe4] sm:$0xf]
  %v80 = vld [vmem:[%s1 + $0xe8] sm:$0xf]
  %v81 = vld [vmem:[%s1 + $0xec] sm:$0xf]
  %v82 = vld [vmem:[%s1 + $0xf0] sm:$0xf]
  %v83 = vld [vmem:[%s1 + $0xf4] sm:$0xf]
  %v84 = vld [vmem:[%s1 + $0xf8] sm:$0xf]
  %v85 = vld [vmem:[%s1 + $0xfc] sm:$0xf]
  %v86 = vld [vmem:[%s1 + $0x100] sm:$0xf]
  %v87 = vld [vmem:[%s1 + $0x104] sm:$0xf]
  %v88 = vld [vmem:[%s1 + $0x108] sm:$0xf]
  %v89 = vld [vmem:[%s1 + $0x10c] sm:$0xf]
  %v90 = vld [vmem:[%s1 + $0x110] sm:$0xf]
  %v91 = vld [vmem:[%s1 + $0x114] sm:$0xf]
  %v92 = vld [vmem:[%s1 + $0x118] sm:$0xf]
  %v93 = vld [vmem:[%s1 + $0x11c] sm:$0xf]
  %v94 = vld [vmem:[%s1 + $0x120] sm:$0xf]
  %v95 = vld [vmem:[%s1 + $0x124] sm:$0xf]
  %v96 = vld [vmem:[%s1 + $0x128] sm:$0xf]
  %v97 = vld [vmem:[%s1 + $0x12c] sm:$0xf]
  %v98 = vld [vmem:[%s1 + $0x130] sm:$0xf]
  %v99 = vld [vmem:[%s1 + $0x134] sm:$0xf]
  %v100 = vld [vmem:[%s1 + $0x138] sm:$0xf]
  %v101 = vld [vmem:[%s1 + $0x13c] sm:$0xf]
  %v102 = vld [vmem:[%s1 + $0x140] sm:$0xf]
  %v103 = vld [vmem:[%s1 + $0x144] sm:$0xf]
  %v104 = vld [vmem:[%s1 + $0x148] sm:$0xf]
  %v105 = vld [vmem:[%s1 + $0x14c] sm:$0xf]
  %v106 = vld [vmem:[%s1 + $0x150] sm:$0xf]
  %v107 = vld [vmem:[%s1 + $0x154] sm:$0xf]
  %v108 = vld [vmem:[%s1 + $0x158] sm:$0xf]
  %v109 = vld [vmem:[%s1 + $0x15c] sm:$0xf]
  %v110 = vld [vmem:[%s1 + $0x160] sm:$0xf]
  %v111 = vld [vmem:[%s1 + $0x164] sm:$0xf]
  %v112 = vld [vmem:[%s1 + $0x168] sm:$0xf]
  %v113 = vld [vmem:[%s1 + $0x16c] sm:$0xf]
  %v114 = vld [vmem:[%s1 + $0x170] sm:$0xf]
  %v115 = vld [vmem:[%s1 + $0x174] sm:$0xf]
  %v116 = vld [vmem:[%s1 + $0x178] sm:$0xf]
  %v117 = vld [vmem:[%s1 + $0x17c] sm:$0xf]
  %v118 = vld [vmem:[%s1 + $0x180] sm:$0xf]
  %v119 = vld [vmem:[%s1 + $0x184] sm:$0xf]
  %v120 = vld [vmem:[%s1 + $0x188] sm:$0xf]
  %v121 = vld [vmem:[%s1 + $0x18c] sm:$0xf]
  %v122 = vld [vmem:[%s1 + $0x190] sm:$0xf]
  %v123 = vld [vmem:[%s1 + $0x194] sm:$0xf]
  %v124 = vld [vmem:[%s1 + $0x198] sm:$0xf]
  %v125 = vld [vmem:[%s1 + $0x19c] sm:$0xf]
  %v126 = vld [vmem:[%s1 + $0x1a0] sm:$0xf]
  %v127 = vld [vmem:[%s1 + $0x1a4] sm:$0xf]
  %v128 = vld [vmem:[%s1 + $0x1a8] sm:$0xf]
  %v129 = vld [vmem:[%s1 + $0x1ac] sm:$0xf]
  %v130 = vld [vmem:[%s1 + $0x1b0] sm:$0xf]
  %v131 = vld [vmem:[%s1 + $0x1b4] sm:$0xf]
  %v132 = vld [vmem:[%s1 + $0x1b8] sm:$0xf]
  %v133 = vld [vmem:[%s1 + $0x1bc] sm:$0xf]
  %v134 = vld [vmem:[%s1 + $0x1c0] sm:$0xf]
  %v135 = vld [vmem:[%s1 + $0x1c4] sm:$0xf]
  %v136 = vld [vmem:[%s1 + $0x1c8] sm:$0xf]
  %v137 = vld [vmem:[%s1 + $0x1cc] sm:$0xf]
  %v138 = vld [vmem:[%s1 + $0x1d0] sm:$0xf]
  %v139 = vld [vmem:[%s1 + $0x1d4] sm:$0xf]
  %v140 = vld [vmem:[%s1 + $0x1d8] sm:$0xf]
  %v141 = vld [vmem:[%s1 + $0x1dc] sm:$0xf]
  %v142 = vld [vmem:[%s1 + $0x1e0] sm:$0xf]
  %v143 = vld [vmem:[%s1 + $0x1e4] sm:$0xf]
  %v144 = vld [vmem:[%s1 + $0x1e8] sm:$0xf]
  %v145 = vld [vmem:[%s1 + $0x1ec] sm:$0xf]
  %v146 = vld [vmem:[%s1 + $0x1f0] sm:$0xf]
  %v147 = vld [vmem:[%s1 + $0x1f4] sm:$0xf]
  %v148 = vld [vmem:[%s1 + $0x1f8] sm:$0xf]
  %v149 = vld [vmem:[%s1 + $0x1fc] sm:$0xf]
  %v150 = vld [vmem:[%s1 + $0x200] sm:$0xf]
  %v151 = vld [vmem:[%s1 + $0x204] sm:$0xf]
  %v152 = vld [vmem:[%s1 + $0x208] sm:$0xf]
  %v153 = vld [vmem:[%s1 + $0x20c] sm:$0xf]
  %v154 = vld [vmem:[%s1 + $0x210] sm:$0xf]
  %v155 = vld [vmem:[%s1 + $0x214] sm:$0xf]
  %v156 = vld [vmem:[%s1 + $0x218] sm:$0xf]
  %v157 = vld [vmem:[%s1 + $0x21c] sm:$0xf]
  %v158 = vld [vmem:[%s1 + $0x220] sm:$0xf]
  %v159 = vld [vmem:[%s1 + $0x224] sm:$0xf]
  %v160 = vld [vmem:[%s1 + $0x228] sm:$0xf]
  %v161 = vld [vmem:[%s1 + $0x22c] sm:$0xf]
  %v162 = vld [vmem:[%s1 + $0x230] sm:$0xf]
  %v163 = vld [vmem:[%s1 + $0x234] sm:$0xf]
  %v164 = vld [vmem:[%s1 + $0x238] sm:$0xf]
  %v165 = vld [vmem:[%s1 + $0x23c] sm:$0xf]
  %v166 = vld [vmem:[%s1 + $0x240] sm:$0xf]
  %v167 = vld [vmem:[%s1 + $0x244] sm:$0xf]
  %v168 = vld [vmem:[%s1 + $0x248] sm:$0xf]
  %v169 = vld [vmem:[%s1 + $0x24c] sm:$0xf]
  %v170 = vld [vmem:[%s1 + $0x250] sm:$0xf]
  %v171 = vld [vmem:[%s1 + $0x254] sm:$0xf]
  %v172 = vld [vmem:[%s1 + $0x258] sm:$0xf]
  %v173 = vld [vmem:[%s1 + $0x25c] sm:$0xf]
  %v174 = vld [vmem:[%s1 + $0x260] sm:$0xf]
  %v175 = vld [vmem:[%s1 + $0x264] sm:$0xf]
  %v176 = vld [vmem:[%s1 + $0x268] sm:$0xf]
  %v177 = vld [vmem:[%s1 + $0x26c] sm:$0xf]
  %v178 = vld [vmem:[%s1 + $0x270] sm:$0xf]
  %v179 = vld [vmem:[%s1 + $0x274] sm:$0xf]
  %v180 = vld [vmem:[%s1 + $0x278] sm:$0xf]
  %v181 = vld [vmem:[%s1 + $0x27c] sm:$0xf]
  %v182 = vld [vmem:[%s1 + $0x280] sm:$0xf]
  %v183 = vld [vmem:[%s1 + $0x284] sm:$0xf]
  %v184 = vld [vmem:[%s1 + $0x288] sm:$0xf]
  %v185 = vld [vmem:[%s1 + $0x28c] sm:$0xf]
  %v186 = vld [vmem:[%s1 + $0x290] sm:$0xf]
  %v187 = vld [vmem:[%s1 + $0x294] sm:$0xf]
  %v188 = vld [vmem:[%s1 + $0x298] sm:$0xf]
  %v189 = vld [vmem:[%s1 + $0x29c] sm:$0xf]
  %v190 = vld [vmem:[%s1 + $0x2a0] sm:$0xf]
  %v191 = vld [vmem:[%s1 + $0x2a4] sm:$0xf]
  %v192 = vld [vmem:[%s1 + $0x2a8] sm:$0xf]
  %v193 = vld [vmem:[%s1 + $0x2ac] sm:$0xf]
  %v194 = vld [vmem:[%s1 + $0x2b0] sm:$0xf]
  %v195 = vld [vmem:[%s1 + $0x2b4] sm:$0xf]
  %v196 = vld [vmem:[%s1 + $0x2b8] sm:$0xf]
  %v197 = vld [vmem:[%s1 + $0x2bc] sm:$0xf]
  %v198 = vld [vmem:[%s1 + $0x2c0] sm:$0xf]
  %v199 = vld [vmem:[%s1 + $0x2c4] sm:$0xf]
  %v200 = vld [vmem:[%s1 + $0x2c8] sm:$0xf]
  %v201 = vld [vmem:[%s1 + $0x2cc] sm:$0xf]
  %v202 = vld [vmem:[%s1 + $0x2d0] sm:$0xf]
  %v203 = vld [vmem:[%s1 + $0x2d4] sm:$0xf]
  %v204 = vld [vmem:[%s1 + $0x2d8] sm:$0xf]
  %v205 = vld [vmem:[%s1 + $0x2dc] sm:$0xf]
  %v206 = vld [vmem:[%s1 + $0x2e0] sm:$0xf]
  %v207 = vld [vmem:[%s1 + $0x2e4] sm:$0xf]
  %v208 = vld [vmem:[%s1 + $0x2e8] sm:$0xf]
  %v209 = vld [vmem:[%s1 + $0x2ec] sm:$0xf]
  %v210 = vld [vmem:[%s1 + $0x2f0] sm:$0xf]
  %v211 = vld [vmem:[%s1 + $0x2f4] sm:$0xf]
  %v212 = vld [vmem:[%s1 + $0x2f8] sm:$0xf]
  %v213 = vld [vmem:[%s1 + $0x2fc] sm:$0xf]
  %v214 = vld [vmem:[%s1 + $0x300] sm:$0xf]
  %v215 = vld [vmem:[%s1 + $0x304] sm:$0xf]
  %v216 = vld [vmem:[%s1 + $0x308] sm:$0xf]
  %v217 = vld [vmem:[%s1 + $0x30c] sm:$0xf]
  %v218 = vld [vmem:[%s1 + $0x310] sm:$0xf]
  %v219 = vld [vmem:[%s1 + $0x314] sm:$0xf]
  %v220 = vld [vmem:[%s1 + $0x318] sm:$0xf]
  %v221 = vld [vmem:[%s1 + $0x31c] sm:$0xf]
  %v222 = vld [vmem:[%s1 + $0x320] sm:$0xf]
  %v223 = vld [vmem:[%s1 + $0x324] sm:$0xf]
  %v224 = vld [vmem:[%s1 + $0x328] sm:$0xf]
  %v225 = vld [vmem:[%s1 + $0x32c] sm:$0xf]
  %v226 = vld [vmem:[%s1 + $0x330] sm:$0xf]
  %v227 = vld [vmem:[%s1 + $0x334] sm:$0xf]
  %v228 = vld [vmem:[%s1 + $0x338] sm:$0xf]
  %v229 = vld [vmem:[%s1 + $0x33c] sm:$0xf]
  %v230 = vld [vmem:[%s2] sm:$0x1]
  %v232 = vlaneseq
  %v233 = vshrl.u32 %v232, 7
  %v234 = vsub.s32 0, %v233
  %v235 = vrot.slane %v230, %v234
  %v244 = vunpack.c.l.b16 %v15
  %v245 = vunpack.c.h.b16 %v15
  %v246 = vunpack.c.l.b16 %v16
  %v247 = vunpack.c.h.b16 %v16
  %v248 = vunpack.c.l.b16 %v17
  %v249 = vunpack.c.h.b16 %v17
  %v250 = vunpack.c.l.b16 %v18
  %v251 = vunpack.c.h.b16 %v18
  %v252 = vunpack.c.l.b16 %v19
  %v253 = vunpack.c.h.b16 %v19
  %v254 = vunpack.c.l.b16 %v20
  %v255 = vunpack.c.h.b16 %v20
  %v256 = vunpack.c.l.b16 %v21
  %v257 = vpack.c.b16 %v244, %v244
  %v258 = vpack.c.b16 %v245, %v245
  %v259 = vpack.c.b16 %v246, %v246
  %v260 = vpack.c.b16 %v247, %v247
  %v261 = vpack.c.b16 %v248, %v248
  %v262 = vpack.c.b16 %v249, %v249
  %v263 = vpack.c.b16 %v250, %v250
  %v264 = vpack.c.b16 %v251, %v251
  %v265 = vpack.c.b16 %v252, %v252
  %v266 = vpack.c.b16 %v253, %v253
  %v267 = vpack.c.b16 %v254, %v254
  %v268 = vpack.c.b16 %v255, %v255
  %v269 = vpack.c.b16 %v256, %v256
  %v491 = vunpack.c.l.b16 %v22
  %v492 = vunpack.c.l.b16 %v23
  %v493 = vunpack.c.l.b16 %v24
  %v494 = vunpack.c.l.b16 %v25
  %v495 = vunpack.c.l.b16 %v26
  %v496 = vunpack.c.l.b16 %v27
  %v497 = vunpack.c.l.b16 %v28
  %v498 = vunpack.c.l.b16 %v29
  %v499 = vunpack.c.l.b16 %v30
  %v500 = vunpack.c.l.b16 %v31
  %v501 = vunpack.c.l.b16 %v32
  %v502 = vunpack.c.l.b16 %v33
  %v503 = vunpack.c.l.b16 %v34
  %v504 = vunpack.c.l.b16 %v35
  %v505 = vunpack.c.l.b16 %v36
  %v506 = vunpack.c.l.b16 %v37
  %v507 = vunpack.c.l.b16 %v38
  %v508 = vunpack.c.l.b16 %v39
  %v509 = vunpack.c.l.b16 %v40
  %v510 = vunpack.c.l.b16 %v41
  %v511 = vunpack.c.l.b16 %v42
  %v512 = vunpack.c.l.b16 %v43
  %v513 = vunpack.c.l.b16 %v44
  %v514 = vunpack.c.l.b16 %v45
  %v515 = vunpack.c.l.b16 %v46
  %v516 = vunpack.c.l.b16 %v47
  %v517 = vunpack.c.l.b16 %v48
  %v518 = vunpack.c.l.b16 %v49
  %v519 = vunpack.c.l.b16 %v50
  %v520 = vunpack.c.l.b16 %v51
  %v521 = vunpack.c.l.b16 %v52
  %v522 = vunpack.c.l.b16 %v53
  %v523 = vunpack.c.l.b16 %v54
  %v524 = vunpack.c.l.b16 %v55
  %v525 = vunpack.c.l.b16 %v56
  %v526 = vunpack.c.l.b16 %v57
  %v527 = vunpack.c.l.b16 %v58
  %v528 = vunpack.c.l.b16 %v59
  %v529 = vunpack.c.l.b16 %v60
  %v530 = vunpack.c.l.b16 %v61
  %v531 = vunpack.c.l.b16 %v62
  %v532 = vunpack.c.l.b16 %v63
  %v533 = vunpack.c.l.b16 %v64
  %v534 = vunpack.c.l.b16 %v65
  %v535 = vunpack.c.l.b16 %v66
  %v536 = vunpack.c.l.b16 %v67
  %v537 = vunpack.c.l.b16 %v68
  %v538 = vunpack.c.l.b16 %v69
  %v539 = vunpack.c.l.b16 %v70
  %v540 = vunpack.c.l.b16 %v71
  %v541 = vunpack.c.l.b16 %v72
  %v542 = vunpack.c.l.b16 %v73
  %v543 = vunpack.c.l.b16 %v74
  %v544 = vunpack.c.l.b16 %v75
  %v545 = vunpack.c.l.b16 %v76
  %v546 = vunpack.c.l.b16 %v77
  %v547 = vunpack.c.l.b16 %v78
  %v548 = vunpack.c.l.b16 %v79
  %v549 = vunpack.c.l.b16 %v80
  %v550 = vunpack.c.l.b16 %v81
  %v551 = vunpack.c.l.b16 %v82
  %v552 = vunpack.c.l.b16 %v83
  %v553 = vunpack.c.l.b16 %v84
  %v554 = vunpack.c.l.b16 %v85
  %v555 = vunpack.c.l.b16 %v86
  %v556 = vunpack.c.l.b16 %v87
  %v557 = vunpack.c.l.b16 %v88
  %v558 = vunpack.c.l.b16 %v89
  %v559 = vunpack.c.l.b16 %v90
  %v560 = vunpack.c.l.b16 %v91
  %v561 = vunpack.c.l.b16 %v92
  %v562 = vunpack.c.l.b16 %v93
  %v563 = vunpack.c.l.b16 %v94
  %v564 = vunpack.c.l.b16 %v95
  %v565 = vunpack.c.l.b16 %v96
  %v566 = vunpack.c.l.b16 %v97
  %v567 = vunpack.c.l.b16 %v98
  %v568 = vunpack.c.l.b16 %v99
  %v569 = vunpack.c.l.b16 %v100
  %v570 = vunpack.c.l.b16 %v101
  %v571 = vunpack.c.l.b16 %v102
  %v572 = vunpack.c.l.b16 %v103
  %v573 = vunpack.c.l.b16 %v104
  %v574 = vunpack.c.l.b16 %v105
  %v575 = vunpack.c.l.b16 %v106
  %v576 = vunpack.c.l.b16 %v107
  %v577 = vunpack.c.l.b16 %v108
  %v578 = vunpack.c.l.b16 %v109
  %v579 = vunpack.c.l.b16 %v110
  %v580 = vunpack.c.l.b16 %v111
  %v581 = vunpack.c.l.b16 %v112
  %v582 = vunpack.c.l.b16 %v113
  %v583 = vunpack.c.l.b16 %v114
  %v584 = vunpack.c.l.b16 %v115
  %v585 = vunpack.c.l.b16 %v116
  %v586 = vunpack.c.l.b16 %v117
  %v587 = vunpack.c.l.b16 %v118
  %v588 = vunpack.c.l.b16 %v119
  %v589 = vunpack.c.l.b16 %v120
  %v590 = vunpack.c.l.b16 %v121
  %v591 = vunpack.c.l.b16 %v122
  %v592 = vunpack.c.l.b16 %v123
  %v593 = vunpack.c.l.b16 %v124
  %v594 = vunpack.c.l.b16 %v125
  %v595 = vunpack.c.l.b16 %v126
  %v596 = vunpack.c.l.b16 %v127
  %v597 = vunpack.c.l.b16 %v128
  %v598 = vunpack.c.l.b16 %v129
  %v599 = vunpack.c.l.b16 %v130
  %v600 = vunpack.c.l.b16 %v131
  %v601 = vunpack.c.l.b16 %v132
  %v602 = vunpack.c.l.b16 %v133
  %v603 = vunpack.c.l.b16 %v134
  %v604 = vunpack.c.l.b16 %v135
  %v605 = vunpack.c.l.b16 %v136
  %v606 = vunpack.c.l.b16 %v137
  %v607 = vunpack.c.l.b16 %v138
  %v608 = vunpack.c.l.b16 %v139
  %v609 = vunpack.c.l.b16 %v140
  %v610 = vunpack.c.l.b16 %v141
  %v611 = vunpack.c.l.b16 %v142
  %v612 = vunpack.c.l.b16 %v143
  %v613 = vunpack.c.l.b16 %v144
  %v614 = vunpack.c.l.b16 %v145
  %v615 = vunpack.c.l.b16 %v146
  %v616 = vunpack.c.l.b16 %v147
  %v617 = vunpack.c.l.b16 %v148
  %v618 = vunpack.c.l.b16 %v149
  %v619 = vunpack.c.l.b16 %v150
  %v620 = vunpack.c.l.b16 %v151
  %v621 = vunpack.c.l.b16 %v152
  %v622 = vunpack.c.l.b16 %v153
  %v623 = vunpack.c.l.b16 %v154
  %v624 = vunpack.c.l.b16 %v155
  %v625 = vunpack.c.l.b16 %v156
  %v626 = vunpack.c.l.b16 %v157
  %v627 = vunpack.c.l.b16 %v158
  %v628 = vunpack.c.l.b16 %v159
  %v629 = vunpack.c.l.b16 %v160
  %v630 = vunpack.c.l.b16 %v161
  %v631 = vunpack.c.l.b16 %v162
  %v632 = vunpack.c.l.b16 %v163
  %v633 = vunpack.c.l.b16 %v164
  %v634 = vunpack.c.l.b16 %v165
  %v635 = vunpack.c.l.b16 %v166
  %v636 = vunpack.c.l.b16 %v167
  %v637 = vunpack.c.l.b16 %v168
  %v638 = vunpack.c.l.b16 %v169
  %v639 = vunpack.c.l.b16 %v170
  %v640 = vunpack.c.l.b16 %v171
  %v641 = vunpack.c.l.b16 %v172
  %v642 = vunpack.c.l.b16 %v173
  %v643 = vunpack.c.l.b16 %v174
  %v644 = vunpack.c.l.b16 %v175
  %v645 = vunpack.c.l.b16 %v176
  %v646 = vunpack.c.l.b16 %v177
  %v647 = vunpack.c.l.b16 %v178
  %v648 = vunpack.c.l.b16 %v179
  %v649 = vunpack.c.l.b16 %v180
  %v650 = vunpack.c.l.b16 %v181
  %v651 = vunpack.c.l.b16 %v182
  %v652 = vunpack.c.l.b16 %v183
  %v653 = vunpack.c.l.b16 %v184
  %v654 = vunpack.c.l.b16 %v185
  %v655 = vunpack.c.l.b16 %v186
  %v656 = vunpack.c.l.b16 %v187
  %v657 = vunpack.c.l.b16 %v188
  %v658 = vunpack.c.l.b16 %v189
  %v659 = vunpack.c.l.b16 %v190
  %v660 = vunpack.c.l.b16 %v191
  %v661 = vunpack.c.l.b16 %v192
  %v662 = vunpack.c.l.b16 %v193
  %v663 = vunpack.c.l.b16 %v194
  %v664 = vunpack.c.l.b16 %v195
  %v665 = vunpack.c.l.b16 %v196
  %v666 = vunpack.c.l.b16 %v197
  %v667 = vunpack.c.l.b16 %v198
  %v668 = vunpack.c.l.b16 %v199
  %v669 = vunpack.c.l.b16 %v200
  %v670 = vunpack.c.l.b16 %v201
  %v671 = vunpack.c.l.b16 %v202
  %v672 = vunpack.c.l.b16 %v203
  %v673 = vunpack.c.l.b16 %v204
  %v674 = vunpack.c.l.b16 %v205
  %v675 = vunpack.c.l.b16 %v206
  %v676 = vunpack.c.l.b16 %v207
  %v677 = vunpack.c.l.b16 %v208
  %v678 = vunpack.c.l.b16 %v209
  %v679 = vunpack.c.l.b16 %v210
  %v680 = vunpack.c.l.b16 %v211
  %v681 = vunpack.c.l.b16 %v212
  %v682 = vunpack.c.l.b16 %v213
  %v683 = vunpack.c.l.b16 %v214
  %v684 = vunpack.c.l.b16 %v215
  %v685 = vunpack.c.l.b16 %v216
  %v686 = vunpack.c.l.b16 %v217
  %v687 = vunpack.c.l.b16 %v218
  %v688 = vunpack.c.l.b16 %v219
  %v689 = vunpack.c.l.b16 %v220
  %v690 = vunpack.c.l.b16 %v221
  %v691 = vunpack.c.l.b16 %v222
  %v692 = vunpack.c.l.b16 %v223
  %v693 = vunpack.c.l.b16 %v224
  %v694 = vunpack.c.l.b16 %v225
  %v695 = vunpack.c.l.b16 %v226
  %v696 = vunpack.c.l.b16 %v227
  %v697 = vunpack.c.l.b16 %v228
  %v698 = vunpack.c.l.b16 %v229
  %v699 = vpack.c.b16 %v492, %v491
  %v700 = vpack.c.b16 %v494, %v493
  %v701 = vpack.c.b16 %v496, %v495
  %v702 = vpack.c.b16 %v498, %v497
  %v703 = vpack.c.b16 %v500, %v499
  %v704 = vpack.c.b16 %v502, %v501
  %v705 = vpack.c.b16 %v504, %v503
  %v706 = vpack.c.b16 %v506, %v505
  %v707 = vpack.c.b16 %v508, %v507
  %v708 = vpack.c.b16 %v510, %v509
  %v709 = vpack.c.b16 %v512, %v511
  %v710 = vpack.c.b16 %v514, %v513
  %v711 = vpack.c.b16 %v516, %v515
  %v712 = vpack.c.b16 %v518, %v517
  %v713 = vpack.c.b16 %v520, %v519
  %v714 = vpack.c.b16 %v522, %v521
  %v715 = vpack.c.b16 %v524, %v523
  %v716 = vpack.c.b16 %v526, %v525
  %v717 = vpack.c.b16 %v528, %v527
  %v718 = vpack.c.b16 %v530, %v529
  %v719 = vpack.c.b16 %v532, %v531
  %v720 = vpack.c.b16 %v534, %v533
  %v721 = vpack.c.b16 %v536, %v535
  %v722 = vpack.c.b16 %v538, %v537
  %v723 = vpack.c.b16 %v540, %v539
  %v724 = vpack.c.b16 %v542, %v541
  %v725 = vpack.c.b16 %v544, %v543
  %v726 = vpack.c.b16 %v546, %v545
  %v727 = vpack.c.b16 %v548, %v547
  %v728 = vpack.c.b16 %v550, %v549
  %v729 = vpack.c.b16 %v552, %v551
  %v730 = vpack.c.b16 %v554, %v553
  %v731 = vpack.c.b16 %v556, %v555
  %v732 = vpack.c.b16 %v558, %v557
  %v733 = vpack.c.b16 %v560, %v559
  %v734 = vpack.c.b16 %v562, %v561
  %v735 = vpack.c.b16 %v564, %v563
  %v736 = vpack.c.b16 %v566, %v565
  %v737 = vpack.c.b16 %v568, %v567
  %v738 = vpack.c.b16 %v570, %v569
  %v739 = vpack.c.b16 %v572, %v571
  %v740 = vpack.c.b16 %v574, %v573
  %v741 = vpack.c.b16 %v576, %v575
  %v742 = vpack.c.b16 %v578, %v577
  %v743 = vpack.c.b16 %v580, %v579
  %v744 = vpack.c.b16 %v582, %v581
  %v745 = vpack.c.b16 %v584, %v583
  %v746 = vpack.c.b16 %v586, %v585
  %v747 = vpack.c.b16 %v588, %v587
  %v748 = vpack.c.b16 %v590, %v589
  %v749 = vpack.c.b16 %v592, %v591
  %v750 = vpack.c.b16 %v594, %v593
  %v751 = vpack.c.b16 %v596, %v595
  %v752 = vpack.c.b16 %v598, %v597
  %v753 = vpack.c.b16 %v600, %v599
  %v754 = vpack.c.b16 %v602, %v601
  %v755 = vpack.c.b16 %v604, %v603
  %v756 = vpack.c.b16 %v606, %v605
  %v757 = vpack.c.b16 %v608, %v607
  %v758 = vpack.c.b16 %v610, %v609
  %v759 = vpack.c.b16 %v612, %v611
  %v760 = vpack.c.b16 %v614, %v613
  %v761 = vpack.c.b16 %v616, %v615
  %v762 = vpack.c.b16 %v618, %v617
  %v763 = vpack.c.b16 %v620, %v619
  %v764 = vpack.c.b16 %v622, %v621
  %v765 = vpack.c.b16 %v624, %v623
  %v766 = vpack.c.b16 %v626, %v625
  %v767 = vpack.c.b16 %v628, %v627
  %v768 = vpack.c.b16 %v630, %v629
  %v769 = vpack.c.b16 %v632, %v631
  %v770 = vpack.c.b16 %v634, %v633
  %v771 = vpack.c.b16 %v636, %v635
  %v772 = vpack.c.b16 %v638, %v637
  %v773 = vpack.c.b16 %v640, %v639
  %v774 = vpack.c.b16 %v642, %v641
  %v775 = vpack.c.b16 %v644, %v643
  %v776 = vpack.c.b16 %v646, %v645
  %v777 = vpack.c.b16 %v648, %v647
  %v778 = vpack.c.b16 %v650, %v649
  %v779 = vpack.c.b16 %v652, %v651
  %v780 = vpack.c.b16 %v654, %v653
  %v781 = vpack.c.b16 %v656, %v655
  %v782 = vpack.c.b16 %v658, %v657
  %v783 = vpack.c.b16 %v660, %v659
  %v784 = vpack.c.b16 %v662, %v661
  %v785 = vpack.c.b16 %v664, %v663
  %v786 = vpack.c.b16 %v666, %v665
  %v787 = vpack.c.b16 %v668, %v667
  %v788 = vpack.c.b16 %v670, %v669
  %v789 = vpack.c.b16 %v672, %v671
  %v790 = vpack.c.b16 %v674, %v673
  %v791 = vpack.c.b16 %v676, %v675
  %v792 = vpack.c.b16 %v678, %v677
  %v793 = vpack.c.b16 %v680, %v679
  %v794 = vpack.c.b16 %v682, %v681
  %v795 = vpack.c.b16 %v684, %v683
  %v796 = vpack.c.b16 %v686, %v685
  %v797 = vpack.c.b16 %v688, %v687
  %v798 = vpack.c.b16 %v690, %v689
  %v799 = vpack.c.b16 %v692, %v691
  %v800 = vpack.c.b16 %v694, %v693
  %v801 = vpack.c.b16 %v696, %v695
  %v802 = vpack.c.b16 %v698, %v697
  %907 = vmatprep.subr.bf16.mxu0 0
  %908 = vmatpush1.bf16.msra.mxu0 %v699
  %909 = vmatprep.subr.bf16.mxu0 0
  %910 = vmatpush1.bf16.msra.mxu0 %v700
  %911 = vmatprep.subr.bf16.mxu0 0
  %912 = vmatpush1.bf16.msra.mxu0 %v701
  %913 = vmatprep.subr.bf16.mxu0 0
  %914 = vmatpush1.bf16.msra.mxu0 %v702
  %915 = vmatprep.subr.bf16.mxu0 0
  %916 = vmatpush1.bf16.msra.mxu0 %v703
  %917 = vmatprep.subr.bf16.mxu0 0
  %918 = vmatpush1.bf16.msra.mxu0 %v704
  %919 = vmatprep.subr.bf16.mxu0 0
  %920 = vmatpush1.bf16.msra.mxu0 %v705
  %921 = vmatprep.subr.bf16.mxu0 0
  %922 = vmatpush1.bf16.msra.mxu0 %v706
  %923 = vmatprep.subr.bf16.mxu0 0
  %924 = vmatpush1.bf16.msra.mxu0 %v707
  %925 = vmatprep.subr.bf16.mxu0 0
  %926 = vmatpush1.bf16.msra.mxu0 %v708
  %927 = vmatprep.subr.bf16.mxu0 0
  %928 = vmatpush1.bf16.msra.mxu0 %v709
  %929 = vmatprep.subr.bf16.mxu0 0
  %930 = vmatpush1.bf16.msra.mxu0 %v710
  %931 = vmatprep.subr.bf16.mxu0 0
  %932 = vmatpush1.bf16.msra.mxu0 %v711
  %933 = vmatprep.subr.bf16.mxu0 0
  %934 = vmatpush1.bf16.msra.mxu0 %v712
  %935 = vmatprep.subr.bf16.mxu0 0
  %936 = vmatpush1.bf16.msra.mxu0 %v713
  %937 = vmatprep.subr.bf16.mxu0 0
  %938 = vmatpush1.bf16.msra.mxu0 %v714
  %939 = vmatprep.mubr.bf16.mxu0 %v258
  %940 = vmatmul.mubr.bf16.gmra.mrb[0].mxu0 %v257
  %v941 = vpop.f32.mrb[0].mxu0
  %v942 = vadd.f32 %v235, %v941
  %v943 = vpop.f32.mrb[0].mxu0
  %v944 = vpop.f32.mrb[0].mxu0
  %v945 = vpop.f32.mrb[0].mxu0
  %946 = vdwg.mxu0
  %947 = vmatprep.subr.bf16.mxu0 0
  %948 = vmatpush1.bf16.msra.mxu0 %v715
  %949 = vmatprep.subr.bf16.mxu0 0
  %950 = vmatpush1.bf16.msra.mxu0 %v716
  %951 = vmatprep.subr.bf16.mxu0 0
  %952 = vmatpush1.bf16.msra.mxu0 %v717
  %953 = vmatprep.subr.bf16.mxu0 0
  %954 = vmatpush1.bf16.msra.mxu0 %v718
  %955 = vmatprep.subr.bf16.mxu0 0
  %956 = vmatpush1.bf16.msra.mxu0 %v719
  %957 = vmatprep.subr.bf16.mxu0 0
  %958 = vmatpush1.bf16.msra.mxu0 %v720
  %959 = vmatprep.subr.bf16.mxu0 0
  %960 = vmatpush1.bf16.msra.mxu0 %v721
  %961 = vmatprep.subr.bf16.mxu0 0
  %962 = vmatpush1.bf16.msra.mxu0 %v722
  %963 = vmatprep.subr.bf16.mxu0 0
  %964 = vmatpush1.bf16.msra.mxu0 %v723
  %965 = vmatprep.subr.bf16.mxu0 0
  %966 = vmatpush1.bf16.msra.mxu0 %v724
  %967 = vmatprep.subr.bf16.mxu0 0
  %968 = vmatpush1.bf16.msra.mxu0 %v725
  %969 = vmatprep.subr.bf16.mxu0 0
  %970 = vmatpush1.bf16.msra.mxu0 %v726
  %971 = vmatprep.subr.bf16.mxu0 0
  %972 = vmatpush1.bf16.msra.mxu0 %v727
  %973 = vmatprep.subr.bf16.mxu0 0
  %974 = vmatpush1.bf16.msra.mxu0 %v728
  %975 = vmatprep.subr.bf16.mxu0 0
  %976 = vmatpush1.bf16.msra.mxu0 %v729
  %977 = vmatprep.subr.bf16.mxu0 0
  %978 = vmatpush1.bf16.msra.mxu0 %v730
  %979 = vmatprep.mubr.bf16.mxu0 %v260
  %980 = vmatmul.mubr.bf16.gmra.mrb[0].mxu0 %v259
  %v981 = vpop.f32.mrb[0].mxu0
  %v982 = vadd.f32 %v942, %v981
  %v983 = vpop.f32.mrb[0].mxu0
  %v984 = vpop.f32.mrb[0].mxu0
  %v985 = vpop.f32.mrb[0].mxu0
  %986 = vdwg.mxu0
  %987 = vmatprep.subr.bf16.mxu0 0
  %988 = vmatpush1.bf16.msra.mxu0 %v731
  %989 = vmatprep.subr.bf16.mxu0 0
  %990 = vmatpush1.bf16.msra.mxu0 %v732
  %991 = vmatprep.subr.bf16.mxu0 0
  %992 = vmatpush1.bf16.msra.mxu0 %v733
  %993 = vmatprep.subr.bf16.mxu0 0
  %994 = vmatpush1.bf16.msra.mxu0 %v734
  %995 = vmatprep.subr.bf16.mxu0 0
  %996 = vmatpush1.bf16.msra.mxu0 %v735
  %997 = vmatprep.subr.bf16.mxu0 0
  %998 = vmatpush1.bf16.msra.mxu0 %v736
  %999 = vmatprep.subr.bf16.mxu0 0
  %1000 = vmatpush1.bf16.msra.mxu0 %v737
  %1001 = vmatprep.subr.bf16.mxu0 0
  %1002 = vmatpush1.bf16.msra.mxu0 %v738
  %1003 = vmatprep.subr.bf16.mxu0 0
  %1004 = vmatpush1.bf16.msra.mxu0 %v739
  %1005 = vmatprep.subr.bf16.mxu0 0
  %1006 = vmatpush1.bf16.msra.mxu0 %v740
  %1007 = vmatprep.subr.bf16.mxu0 0
  %1008 = vmatpush1.bf16.msra.mxu0 %v741
  %1009 = vmatprep.subr.bf16.mxu0 0
  %1010 = vmatpush1.bf16.msra.mxu0 %v742
  %1011 = vmatprep.subr.bf16.mxu0 0
  %1012 = vmatpush1.bf16.msra.mxu0 %v743
  %1013 = vmatprep.subr.bf16.mxu0 0
  %1014 = vmatpush1.bf16.msra.mxu0 %v744
  %1015 = vmatprep.subr.bf16.mxu0 0
  %1016 = vmatpush1.bf16.msra.mxu0 %v745
  %1017 = vmatprep.subr.bf16.mxu0 0
  %1018 = vmatpush1.bf16.msra.mxu0 %v746
  %1019 = vmatprep.mubr.bf16.mxu0 %v262
  %1020 = vmatmul.mubr.bf16.gmra.mrb[0].mxu0 %v261
  %v1021 = vpop.f32.mrb[0].mxu0
  %v1022 = vadd.f32 %v982, %v1021
  %v1023 = vpop.f32.mrb[0].mxu0
  %v1024 = vpop.f32.mrb[0].mxu0
  %v1025 = vpop.f32.mrb[0].mxu0
  %1026 = vdwg.mxu0
  %1027 = vmatprep.subr.bf16.mxu0 0
  %1028 = vmatpush1.bf16.msra.mxu0 %v747
  %1029 = vmatprep.subr.bf16.mxu0 0
  %1030 = vmatpush1.bf16.msra.mxu0 %v748
  %1031 = vmatprep.subr.bf16.mxu0 0
  %1032 = vmatpush1.bf16.msra.mxu0 %v749
  %1033 = vmatprep.subr.bf16.mxu0 0
  %1034 = vmatpush1.bf16.msra.mxu0 %v750
  %1035 = vmatprep.subr.bf16.mxu0 0
  %1036 = vmatpush1.bf16.msra.mxu0 %v751
  %1037 = vmatprep.subr.bf16.mxu0 0
  %1038 = vmatpush1.bf16.msra.mxu0 %v752
  %1039 = vmatprep.subr.bf16.mxu0 0
  %1040 = vmatpush1.bf16.msra.mxu0 %v753
  %1041 = vmatprep.subr.bf16.mxu0 0
  %1042 = vmatpush1.bf16.msra.mxu0 %v754
  %1043 = vmatprep.subr.bf16.mxu0 0
  %1044 = vmatpush1.bf16.msra.mxu0 %v755
  %1045 = vmatprep.subr.bf16.mxu0 0
  %1046 = vmatpush1.bf16.msra.mxu0 %v756
  %1047 = vmatprep.subr.bf16.mxu0 0
  %1048 = vmatpush1.bf16.msra.mxu0 %v757
  %1049 = vmatprep.subr.bf16.mxu0 0
  %1050 = vmatpush1.bf16.msra.mxu0 %v758
  %1051 = vmatprep.subr.bf16.mxu0 0
  %1052 = vmatpush1.bf16.msra.mxu0 %v759
  %1053 = vmatprep.subr.bf16.mxu0 0
  %1054 = vmatpush1.bf16.msra.mxu0 %v760
  %1055 = vmatprep.subr.bf16.mxu0 0
  %1056 = vmatpush1.bf16.msra.mxu0 %v761
  %1057 = vmatprep.subr.bf16.mxu0 0
  %1058 = vmatpush1.bf16.msra.mxu0 %v762
  %1059 = vmatprep.mubr.bf16.mxu0 %v264
  %1060 = vmatmul.mubr.bf16.gmra.mrb[0].mxu0 %v263
  %v1061 = vpop.f32.mrb[0].mxu0
  %v1062 = vadd.f32 %v1022, %v1061
  %v1063 = vpop.f32.mrb[0].mxu0
  %v1064 = vpop.f32.mrb[0].mxu0
  %v1065 = vpop.f32.mrb[0].mxu0
  %1066 = vdwg.mxu0
  %1067 = vmatprep.subr.bf16.mxu0 0
  %1068 = vmatpush1.bf16.msra.mxu0 %v763
  %1069 = vmatprep.subr.bf16.mxu0 0
  %1070 = vmatpush1.bf16.msra.mxu0 %v764
  %1071 = vmatprep.subr.bf16.mxu0 0
  %1072 = vmatpush1.bf16.msra.mxu0 %v765
  %1073 = vmatprep.subr.bf16.mxu0 0
  %1074 = vmatpush1.bf16.msra.mxu0 %v766
  %1075 = vmatprep.subr.bf16.mxu0 0
  %1076 = vmatpush1.bf16.msra.mxu0 %v767
  %1077 = vmatprep.subr.bf16.mxu0 0
  %1078 = vmatpush1.bf16.msra.mxu0 %v768
  %1079 = vmatprep.subr.bf16.mxu0 0
  %1080 = vmatpush1.bf16.msra.mxu0 %v769
  %1081 = vmatprep.subr.bf16.mxu0 0
  %1082 = vmatpush1.bf16.msra.mxu0 %v770
  %1083 = vmatprep.subr.bf16.mxu0 0
  %1084 = vmatpush1.bf16.msra.mxu0 %v771
  %1085 = vmatprep.subr.bf16.mxu0 0
  %1086 = vmatpush1.bf16.msra.mxu0 %v772
  %1087 = vmatprep.subr.bf16.mxu0 0
  %1088 = vmatpush1.bf16.msra.mxu0 %v773
  %1089 = vmatprep.subr.bf16.mxu0 0
  %1090 = vmatpush1.bf16.msra.mxu0 %v774
  %1091 = vmatprep.subr.bf16.mxu0 0
  %1092 = vmatpush1.bf16.msra.mxu0 %v775
  %1093 = vmatprep.subr.bf16.mxu0 0
  %1094 = vmatpush1.bf16.msra.mxu0 %v776
  %1095 = vmatprep.subr.bf16.mxu0 0
  %1096 = vmatpush1.bf16.msra.mxu0 %v777
  %1097 = vmatprep.subr.bf16.mxu0 0
  %1098 = vmatpush1.bf16.msra.mxu0 %v778
  %1099 = vmatprep.mubr.bf16.mxu0 %v266
  %1100 = vmatmul.mubr.bf16.gmra.mrb[0].mxu0 %v265
  %v1101 = vpop.f32.mrb[0].mxu0
  %v1102 = vadd.f32 %v1062, %v1101
  %v1103 = vpop.f32.mrb[0].mxu0
  %v1104 = vpop.f32.mrb[0].mxu0
  %v1105 = vpop.f32.mrb[0].mxu0
  %1106 = vdwg.mxu0
  %1107 = vmatprep.subr.bf16.mxu0 0
  %1108 = vmatpush1.bf16.msra.mxu0 %v779
  %1109 = vmatprep.subr.bf16.mxu0 0
  %1110 = vmatpush1.bf16.msra.mxu0 %v780
  %1111 = vmatprep.subr.bf16.mxu0 0
  %1112 = vmatpush1.bf16.msra.mxu0 %v781
  %1113 = vmatprep.subr.bf16.mxu0 0
  %1114 = vmatpush1.bf16.msra.mxu0 %v782
  %1115 = vmatprep.subr.bf16.mxu0 0
  %1116 = vmatpush1.bf16.msra.mxu0 %v783
  %1117 = vmatprep.subr.bf16.mxu0 0
  %1118 = vmatpush1.bf16.msra.mxu0 %v784
  %1119 = vmatprep.subr.bf16.mxu0 0
  %1120 = vmatpush1.bf16.msra.mxu0 %v785
  %1121 = vmatprep.subr.bf16.mxu0 0
  %1122 = vmatpush1.bf16.msra.mxu0 %v786
  %1123 = vmatprep.subr.bf16.mxu0 0
  %1124 = vmatpush1.bf16.msra.mxu0 %v787
  %1125 = vmatprep.subr.bf16.mxu0 0
  %1126 = vmatpush1.bf16.msra.mxu0 %v788
  %1127 = vmatprep.subr.bf16.mxu0 0
  %1128 = vmatpush1.bf16.msra.mxu0 %v789
  %1129 = vmatprep.subr.bf16.mxu0 0
  %1130 = vmatpush1.bf16.msra.mxu0 %v790
  %1131 = vmatprep.subr.bf16.mxu0 0
  %1132 = vmatpush1.bf16.msra.mxu0 %v791
  %1133 = vmatprep.subr.bf16.mxu0 0
  %1134 = vmatpush1.bf16.msra.mxu0 %v792
  %1135 = vmatprep.subr.bf16.mxu0 0
  %1136 = vmatpush1.bf16.msra.mxu0 %v793
  %1137 = vmatprep.subr.bf16.mxu0 0
  %1138 = vmatpush1.bf16.msra.mxu0 %v794
  %1139 = vmatprep.mubr.bf16.mxu0 %v268
  %1140 = vmatmul.mubr.bf16.gmra.mrb[0].mxu0 %v267
  %v1141 = vpop.f32.mrb[0].mxu0
  %v1142 = vadd.f32 %v1102, %v1141
  %v1143 = vpop.f32.mrb[0].mxu0
  %v1144 = vpop.f32.mrb[0].mxu0
  %v1145 = vpop.f32.mrb[0].mxu0
  %1146 = vdwg.mxu0
  %1147 = vmatprep.subr.bf16.mxu0 0
  %1148 = vmatpush1.bf16.msra.mxu0 %v795
  %1149 = vmatprep.subr.bf16.mxu0 0
  %1150 = vmatpush1.bf16.msra.mxu0 %v796
  %1151 = vmatprep.subr.bf16.mxu0 0
  %1152 = vmatpush1.bf16.msra.mxu0 %v797
  %1153 = vmatprep.subr.bf16.mxu0 0
  %1154 = vmatpush1.bf16.msra.mxu0 %v798
  %1155 = vmatprep.subr.bf16.mxu0 0
  %1156 = vmatpush1.bf16.msra.mxu0 %v799
  %1157 = vmatprep.subr.bf16.mxu0 0
  %1158 = vmatpush1.bf16.msra.mxu0 %v800
  %1159 = vmatprep.subr.bf16.mxu0 0
  %1160 = vmatpush1.bf16.msra.mxu0 %v801
  %1161 = vmatprep.subr.bf16.mxu0 0
  %1162 = vmatpush1.bf16.msra.mxu0 %v802
  %1163 = vmatprep.subr.bf16.mxu0 0
  %1164 = vmatpush1.bf16.msra.mxu0 0
  %1165 = vmatprep.subr.bf16.mxu0 0
  %1166 = vmatpush1.bf16.msra.mxu0 0
  %1167 = vmatprep.subr.bf16.mxu0 0
  %1168 = vmatpush1.bf16.msra.mxu0 0
  %1169 = vmatprep.subr.bf16.mxu0 0
  %1170 = vmatpush1.bf16.msra.mxu0 0
  %1171 = vmatprep.subr.bf16.mxu0 0
  %1172 = vmatpush1.bf16.msra.mxu0 0
  %1173 = vmatprep.subr.bf16.mxu0 0
  %1174 = vmatpush1.bf16.msra.mxu0 0
  %1175 = vmatprep.subr.bf16.mxu0 0
  %1176 = vmatpush1.bf16.msra.mxu0 0
  %1177 = vmatprep.subr.bf16.mxu0 0
  %1178 = vmatpush1.bf16.msra.mxu0 0
  %1179 = vmatprep.mubr.bf16.mxu0 0
  %1180 = vmatmul.mubr.bf16.gmra.mrb[0].mxu0 %v269
  %v1181 = vpop.f32.mrb[0].mxu0
  %v1182 = vadd.f32 %v1142, %v1181
  %v1183 = vpop.f32.mrb[0].mxu0
  %v1184 = vpop.f32.mrb[0].mxu0
  %v1185 = vpop.f32.mrb[0].mxu0
  %1186 = vdwg.mxu0
  %vm1187 = vcmask 15360
  %1188 = vst.msk [vmem:[%s3] sm:$0xff] %vm1187, %v1182
  // Predicated region
  $region14: #{tpu_custom_call.1} parent=0 // pred_check
    _
  $region15: #{tpu_custom_call.1} parent=0 // pred_check_branch
    %1190 = sbr.rel (0) target = $region17
  $region16: #{tpu_custom_call.1} parent=0 // pred_region
    _
  $region17: #{tpu_custom_call.1} parent=0 // pred_fallthru
    _
  // Predicated region
  $region18: #{tpu_custom_call.1} parent=0 // pred_check
    _
  $region19: #{tpu_custom_call.1} parent=0 // pred_check_branch
    %1192 = sbr.rel (0) target = $region21
  $region20: #{tpu_custom_call.1} parent=0 // pred_region
    _
  $region21: #{tpu_custom_call.1} parent=0 // pred_fallthru
    _

</llo_original>
